<compile_context>
chip_gen: v7x
topology: tpu7x:2x2x1
jax: 0.10.0
libtpu: 0.0.40
codegen_flags: <defaults>
</compile_context>

<pallas_src>
import math
import jax
import jax.numpy as jnp
from jax.experimental import pallas as pl
from jax.experimental.pallas import tpu as pltpu

M = 10
N = 5
d = 100


def net_kernel(x_ref, w_ref, o_ref):
    # Single fused linear: (block_m, d) @ (d, N) -> (block_m, N), f32 accumulate.
    o_ref[...] = jnp.dot(x_ref[...], w_ref[...],
                         preferred_element_type=jnp.float32)


def _round_up(v, m):
    return ((v + m - 1) // m) * m


def net_forward(x, S, V_weight, *, tm=8192, min_grid_steps=4):
    """x: (B, d); S: (d, M) f32; V_weight: (N, M) f32 (nn.Linear convention).

    Returns (B, N) f32 == (x @ S) @ V_weight.T
    Note: folding W = S @ V.T changes the f32 association vs PyTorch's
    (x@S)@V.T -> tiny f32 drift, well within 1e-4 tolerances.
    """
    B, dd = x.shape
    # Fold the two parameter matrices once (tiny: (d,M)@(M,N) -> (d,N)).
    W = jnp.dot(S, V_weight.T, preferred_element_type=jnp.float32)
    n_out = W.shape[1]

    # Only use bf16 if x genuinely arrives as bf16 from the producer; never
    # pre-cast x in the wrapper (that adds an extra HBM round trip of the
    # dominant operand). Casting the tiny resident W is free.
    if x.dtype == jnp.bfloat16:
        W = W.astype(jnp.bfloat16)

    # Row tile: full array if tiny (block == array dim satisfies the (8,128)
    # rule); otherwise a large multiple-of-8 tile, capped so the grid keeps at
    # least `min_grid_steps` steps (lets v7x's two TCs each stream their own
    # HBM path; harmless on v5e/v6e).
    if B <= 8:
        block_m = B
    else:
        target = _round_up(pl.cdiv(B, min_grid_steps), 8)
        block_m = max(8, min(tm, target))
    grid = (pl.cdiv(B, block_m),)

    # VMEM budget with padded layouts: x block pads to (block_m, 128), the out
    # block ALSO pads to (block_m, 128) lanes (5 -> 128), both double-buffered;
    # W pads to (104, 128) and is resident. Clamp to <= 48 MiB (v7x headroom).
    x_blk_bytes = block_m * 128 * x.dtype.itemsize
    out_blk_bytes = block_m * 128 * 4
    w_bytes = _round_up(dd, 8) * 128 * W.dtype.itemsize
    vmem_bytes = 2 * (x_blk_bytes + out_blk_bytes + w_bytes) + (2 << 20)
    vmem_bytes = int(min(max(vmem_bytes, 4 << 20), 48 << 20))

    return pl.pallas_call(
        net_kernel,
        out_shape=jax.ShapeDtypeStruct((B, n_out), jnp.float32),
        grid=grid,
        in_specs=[
            # x: streamed batch tiles (the only large HBM operand).
            pl.BlockSpec((block_m, dd), lambda i: (i, 0)),
            # W: grid-invariant block -> stays resident in VMEM across steps.
            pl.BlockSpec((dd, n_out), lambda i: (0, 0)),
        ],
        out_specs=pl.BlockSpec((block_m, n_out), lambda i: (i, 0)),
        compiler_params=pltpu.CompilerParams(
            dimension_semantics=("parallel",),
            vmem_limit_bytes=vmem_bytes),
    )(x, W)


if __name__ == "__main__":
    key = jax.random.PRNGKey(0)
    k_x, k_s, k_v, k_x2 = jax.random.split(key, 4)

    # Deterministic "parameters": S ~ (1/sqrt(M)) * N(0,1), V ~ Linear(M, N) init.
    S = (1.0 / math.sqrt(M)) * jax.random.normal(k_s, (d, M), dtype=jnp.float32)
    bound = 1.0 / math.sqrt(M)  # nn.Linear default uniform init bound
    V_weight = jax.random.uniform(k_v, (N, M), dtype=jnp.float32,
                                  minval=-bound, maxval=bound)

    # Small batch: single grid point, full-array blocks.
    B = 8
    x = jax.random.normal(k_x, (B, d), dtype=jnp.float32)
    out = jax.block_until_ready(net_forward(x, S, V_weight))
    ref = (x @ S) @ V_weight.T
    assert out.shape == (B, N)
    assert jnp.allclose(out, ref, atol=1e-4, rtol=1e-4)

    # Larger batch: exercises the multi-tile grid + ragged last tile + the
    # min_grid_steps cap on block_m.
    B2 = 2048 + 37
    x2 = jax.random.normal(k_x2, (B2, d), dtype=jnp.float32)
    out2 = jax.block_until_ready(net_forward(x2, S, V_weight))
    ref2 = (x2 @ S) @ V_weight.T
    assert out2.shape == (B2, N)
    assert jnp.allclose(out2, ref2, atol=1e-4, rtol=1e-4)

    print("KERNEL_OK")
</pallas_src>

<mosaic_0001>
module attributes {stable_mosaic.version = 11 : i64} {
  func.func @net_kernel(%arg0: i32, %arg1: memref<8x100xf32, #tpu.memory_space<vmem>>, %arg2: memref<100x5xf32, #tpu.memory_space<vmem>>, %arg3: memref<8x5xf32, #tpu.memory_space<vmem>>) attributes {dimension_semantics = [#tpu.dimension_semantics<parallel>], iteration_bounds = array<i64: 1>, scalar_prefetch = 0 : i64, scratch_operands = 0 : i64, tpu.core_type = #tpu.core_type<tc>, window_params = [{transform_indices = @transform_0, window_bounds = array<i64: 8, 100>}, {pipeline_mode = #tpu.pipeline_mode<synchronous>, transform_indices = @transform_1, window_bounds = array<i64: 100, 5>}, {transform_indices = @transform_2, window_bounds = array<i64: 8, 5>}]} {
    %c0 = arith.constant 0 : index
    %c0_0 = arith.constant 0 : index
    %0 = vector.load %arg1[%c0, %c0_0] : memref<8x100xf32, #tpu.memory_space<vmem>>, vector<8x100xf32>
    %c0_1 = arith.constant 0 : index
    %c0_2 = arith.constant 0 : index
    %1 = vector.load %arg2[%c0_1, %c0_2] : memref<100x5xf32, #tpu.memory_space<vmem>>, vector<100x5xf32>
    %cst = arith.constant dense<0.000000e+00> : vector<8x5xf32>
    %2 = tpu.matmul %0, %1, %cst {dimension_numbers = #tpu.dot_dimension_numbers<[1], [0], [0], [1], [0, 0, 1, 1], [], []>} : vector<8x100xf32>, vector<100x5xf32>, vector<8x5xf32> -> vector<8x5xf32>
    %c0_3 = arith.constant 0 : index
    %c0_4 = arith.constant 0 : index
    %3 = vector.load %arg3[%c0_3, %c0_4] : memref<8x5xf32, #tpu.memory_space<vmem>>, vector<8x5xf32>
    tpu.vector_store %arg3[%c0_3, %c0_4], %2 {strides = array<i32>} : memref<8x5xf32, #tpu.memory_space<vmem>>, vector<8x5xf32>,
    return
  }
  func.func @transform_0(%arg0: i32) -> (i32, i32) {
    %c0_i32 = arith.constant 0 : i32
    %c0_i32_0 = arith.constant 0 : i32
    return %arg0, %c0_i32 : i32, i32
  }
  func.func @transform_1(%arg0: i32) -> (i32, i32) {
    %c0_i32 = arith.constant 0 : i32
    %c0_i32_0 = arith.constant 0 : i32
    %c0_i32_1 = arith.constant 0 : i32
    return %c0_i32, %c0_i32_0 : i32, i32
  }
  func.func @transform_2(%arg0: i32) -> (i32, i32) {
    %c0_i32 = arith.constant 0 : i32
    %c0_i32_0 = arith.constant 0 : i32
    return %arg0, %c0_i32 : i32, i32
  }
}

</mosaic_0001>

<llo_original>
// kernel: tpu_custom_call.1
$region0: #{tpu_custom_call.1}
  #allocation0 [shape = 'u32[]', space=smem, size = 0x4, offset = 0x4, fixed_abs, tag = 'smem constant byte address 0x4 - core index']
  #allocation1 [shape = 'u32[144,128]{1,0:T(1,128)}', space=vmem, size = 0x12000, scoped, tag = 'internal scratch']
  %s0 = inlined_call_operand.vmem [shape: f32[8,100], index: 0, kind: input, shape index: {}]
  %s1 = inlined_call_operand.vmem [shape: f32[100,5], index: 1, kind: input, shape index: {}]
  %s2 = inlined_call_operand.hbm [shape: f32[8,5], index: 2, kind: output, shape index: {}]
  %s3 = sld [smem:[#allocation0]]
  $region18: #{tpu_custom_call.1} parent=0
    _
  %s5 = ssub.s32 1, %s3
  %s6 = scalar_select 0, %s5, %s3
  $region1: #{tpu_custom_call.1} parent=0
    #allocation2 [shape = 'u8[4096]{0}', space=vmem, size = 0x1000, scoped, tag = 'output window, operand 0, single buffered']
    #allocation3 [shape = 's32[1]{0}', space=sflag, size = 0x4, scoped, tag = 'scoped memory for tpu_custom_call.1']
    %7 = vsyncpa [#allocation3], 0
    // Predicated region
    $region2: #{tpu_custom_call.1} parent=1 // pred_check
      _
    $region3: #{tpu_custom_call.1} parent=1 // pred_check_branch
      %9 = sbr.rel (0) target = $region5
    $region4: #{tpu_custom_call.1} parent=1 // pred_region
      _
    $region5: #{tpu_custom_call.1} parent=1 // pred_fallthru
      _
    // Predicated region
    $region6: #{tpu_custom_call.1} parent=1 // pred_check
      _
    $region7: #{tpu_custom_call.1} parent=1 // pred_check_branch
      %11 = sbr.rel (0) target = $region9
    $region8: #{tpu_custom_call.1} parent=1 // pred_region
      _
    $region9: #{tpu_custom_call.1} parent=1 // pred_fallthru
      _
    %v12 = vld [vmem:[%s0] sm:$0xff]
    %v13 = vld [vmem:[%s1] sm:$0xff]
    %v14 = vld [vmem:[%s1 + $0x8] sm:$0xff]
    %v15 = vld [vmem:[%s1 + $0x10] sm:$0xff]
    %v16 = vld [vmem:[%s1 + $0x18] sm:$0xff]
    %v17 = vld [vmem:[%s1 + $0x20] sm:$0xff]
    %v18 = vld [vmem:[%s1 + $0x28] sm:$0xff]
    %v19 = vld [vmem:[%s1 + $0x30] sm:$0xff]
    %v20 = vld [vmem:[%s1 + $0x38] sm:$0xff]
    %v21 = vld [vmem:[%s1 + $0x40] sm:$0xff]
    %v22 = vld [vmem:[%s1 + $0x48] sm:$0xff]
    %v23 = vld [vmem:[%s1 + $0x50] sm:$0xff]
    %v24 = vld [vmem:[%s1 + $0x58] sm:$0xff]
    %v25 = vld [vmem:[%s1 + $0x60] sm:$0xf]
    %vm26 = vcmask 818176
    %v28 = vsel %vm26, %v12, 0
    %vm30 = vcmask 1043456
    %v32 = vsel %vm30, %v25, 0
    %34 = vmatprep.subr.mxu0 0.0
    %35 = vmatpush1.msra.mxu0 %v13
    %36 = vmatprep.subr.mxu0 0.0
    %37 = vmatpush1.msra.mxu0 %v14
    %38 = vmatprep.subr.mxu0 0.0
    %39 = vmatpush1.msra.mxu0 %v15
    %40 = vmatprep.subr.mxu0 0.0
    %41 = vmatpush1.msra.mxu0 %v16
    %42 = vmatprep.subr.mxu0 0.0
    %43 = vmatpush1.msra.mxu0 %v17
    %44 = vmatprep.subr.mxu0 0.0
    %45 = vmatpush1.msra.mxu0 %v18
    %46 = vmatprep.subr.mxu0 0.0
    %47 = vmatpush1.msra.mxu0 %v19
    %48 = vmatprep.subr.mxu0 0.0
    %49 = vmatpush1.msra.mxu0 %v20
    %50 = vmatprep.subr.mxu0 0.0
    %51 = vmatpush1.msra.mxu0 %v21
    %52 = vmatprep.subr.mxu0 0.0
    %53 = vmatpush1.msra.mxu0 %v22
    %54 = vmatprep.subr.mxu0 0.0
    %55 = vmatpush1.msra.mxu0 %v23
    %56 = vmatprep.subr.mxu0 0.0
    %57 = vmatpush1.msra.mxu0 %v24
    %58 = vmatprep.subr.mxu0 0.0
    %59 = vmatpush1.msra.mxu0 %v32
    %60 = vmatprep.subr.mxu0 0.0
    %61 = vmatpush1.msra.mxu0 0.0
    %62 = vmatprep.subr.mxu0 0.0
    %63 = vmatpush1.msra.mxu0 0.0
    %64 = vmatprep.subr.mxu0 0.0
    %65 = vmatpush1.msra.mxu0 0.0
    %66 = vmatprep.subr.mxu0 0.0
    %67 = vmatpush1.msra.mxu0 0.0
    %68 = vmatprep.subr.mxu0 0.0
    %69 = vmatpush1.msra.mxu0 0.0
    %70 = vmatprep.subr.mxu0 0.0
    %71 = vmatpush1.msra.mxu0 0.0
    %72 = vmatprep.subr.mxu0 0.0
    %73 = vmatpush1.msra.mxu0 0.0
    %74 = vmatprep.subr.mxu0 0.0
    %75 = vmatpush1.msra.mxu0 0.0
    %76 = vmatprep.subr.mxu0 0.0
    %77 = vmatpush1.msra.mxu0 0.0
    %78 = vmatprep.subr.mxu0 0.0
    %79 = vmatpush1.msra.mxu0 0.0
    %80 = vmatprep.subr.mxu0 0.0
    %81 = vmatpush1.msra.mxu0 0.0
    %82 = vmatprep.subr.mxu0 0.0
    %83 = vmatpush1.msra.mxu0 0.0
    %84 = vmatprep.subr.mxu0 0.0
    %85 = vmatpush1.msra.mxu0 0.0
    %86 = vmatprep.subr.mxu0 0.0
    %87 = vmatpush1.msra.mxu0 0.0
    %88 = vmatprep.subr.mxu0 0.0
    %89 = vmatpush1.msra.mxu0 0.0
    %90 = vmatprep.subr.mxu0 0.0
    %91 = vmatpush1.msra.mxu0 0.0
    %92 = vmatprep.subr.mxu0 0.0
    %93 = vmatpush1.msra.mxu0 0.0
    %94 = vmatprep.subr.mxu0 0.0
    %95 = vmatpush1.msra.mxu0 0.0
    %96 = vmatprep.subr.mxu0 0.0
    %97 = vmatpush1.msra.mxu0 0.0
    %98 = vmatprep.mubr.f32.mxu0 0.0
    %99 = vmatmul.mubr.f32.gmra.mrb[0].mxu0 %v28
    %v100 = vpop.f32.mrb[0].mxu0
    %v101 = vadd.f32 0.0, %v100
    %v102 = vpop.f32.mrb[0].mxu0
    %103 = vdwg.mxu0
    %vm104 = vcmask 39936
    %105 = vst.msk [vmem:[#allocation2] sm:$0xff] %vm104, %v101
    // Predicated region
    $region10: #{tpu_custom_call.1} parent=1 // pred_check
      _
    $region11: #{tpu_custom_call.1} parent=1 // pred_check_branch
      %107 = sbr.rel (0) target = $region13
    $region12: #{tpu_custom_call.1} parent=1 // pred_region
      %s109 = ssub.s32 128, 128
      %110 = vsyncadd [#allocation3], %s109
      %s112 = sshll.u32 [#allocation2], 4
      %s113 = int_to_ptr.vmem [resolvable:$true] %s112
      %115 = dma.vmem_to_hbm [thread:$0]  %s113, 128, %s2, [#allocation3]
    $region13: #{tpu_custom_call.1} parent=1 // pred_fallthru
      _
    // Predicated region
    $region14: #{tpu_custom_call.1} parent=1 // pred_check
      _
    $region15: #{tpu_custom_call.1} parent=1 // pred_check_branch
      %117 = sbr.rel (0) target = $region17
    $region16: #{tpu_custom_call.1} parent=1 // pred_region
      %118 = dma.done [#allocation3], 128
    $region17: #{tpu_custom_call.1} parent=1 // pred_fallthru
      _
    %119 = vsyncpa [#allocation3], 1

</llo_original>
